<compile_context>
chip_gen: v7x
topology: tpu7x:2x2x1
jax: 0.10.0
libtpu: 0.0.40
codegen_flags: <defaults>
</compile_context>

<pallas_src>
import functools

import jax
import jax.numpy as jnp
from jax import lax
from jax.experimental import pallas as pl
from jax.experimental.pallas import tpu as pltpu

SUBLANE = 8


def _round_up(x, m):
    return (x + m - 1) // m * m


def _pick_block_b(batch, d, c):
    # Working set per batch row: double-buffered x block + out block + labels.
    # Weights (D, C) and bias are tiny and stay resident.  16 MiB budget keeps
    # the same code safe on v7x (64 MiB VMEM, 32 MiB scoped default) and on
    # v5e/v6e (128 MiB).
    bytes_per_row = 2 * 4 * (d + c + 1)
    vmem_cap = max(SUBLANE, ((16 << 20) // bytes_per_row) // SUBLANE * SUBLANE)
    return max(SUBLANE, min(1024, vmem_cap, _round_up(batch, SUBLANE)))


# ----------------------------------------------------------------------------
# Kernel 1: linear + softmax(dim=1)   (the y=None inference path)
# Blocks: x (tb, D) streamed, w_t (D, C) resident, b (1, C) resident,
# out (tb, C) streamed straight into the (B, C) result — no class padding.
# ----------------------------------------------------------------------------
def _linear_softmax_kernel(x_ref, w_ref, b_ref, o_ref):
    # bf16 operands for the MXU (in-register cast), f32 accumulation.
    logits = jnp.dot(x_ref[...].astype(jnp.bfloat16),
                     w_ref[...].astype(jnp.bfloat16),
                     preferred_element_type=jnp.float32) + b_ref[...]
    m = jnp.max(logits, axis=1, keepdims=True)
    e = jnp.exp(logits - m)
    # exact divide: returned probabilities sum to 1 per row
    o_ref[...] = (e / jnp.sum(e, axis=1, keepdims=True)).astype(o_ref.dtype)


# ----------------------------------------------------------------------------
# Kernel 2 (fused): linear + softmax + CrossEntropyLoss partial sums.
# PyTorch CE applies log_softmax to its input; the module feeds it the softmax
# probabilities, so we faithfully log_softmax the probs.  Since probs ∈ [0,1],
# no max-subtraction is needed: nll = log(sum(exp(probs))) - probs[y].
# Each grid step writes its own (1,1,1) partial-sum block → fully parallel.
# ----------------------------------------------------------------------------
def _fused_loss_kernel(x_ref, w_ref, b_ref, y_ref, part_ref, *, batch, block_b):
    i = pl.program_id(0)

    logits = jnp.dot(x_ref[...].astype(jnp.bfloat16),
                     w_ref[...].astype(jnp.bfloat16),
                     preferred_element_type=jnp.float32) + b_ref[...]

    # softmax (the module's activation), numerically stable
    m = jnp.max(logits, axis=1, keepdims=True)
    e = jnp.exp(logits - m)
    probs = e * pl.reciprocal(jnp.sum(e, axis=1, keepdims=True), approx=True)

    # CrossEntropyLoss's internal log_softmax applied to the probabilities
    lse = jnp.log(jnp.sum(jnp.exp(probs), axis=1, keepdims=True))        # (tb,1)
    col = lax.broadcasted_iota(jnp.int32, probs.shape, 1)
    picked = jnp.sum(jnp.where(col == y_ref[...], probs, 0.0),
                     axis=1, keepdims=True)                              # (tb,1)
    nll = lse - picked                                                   # (tb,1)

    # SELECT (not multiply) keeps undefined ragged-tile rows out of the sum
    row = lax.broadcasted_iota(jnp.int32, nll.shape, 0) + i * block_b
    tile_sum = jnp.sum(jnp.where(row < batch, nll, 0.0))
    part_ref[...] = jnp.reshape(tile_sum, (1, 1, 1))


# ----------------------------------------------------------------------------
# Wrapper
# ----------------------------------------------------------------------------
@functools.partial(jax.jit, static_argnames=("with_loss",))
def torch_model_forward(x, w_t, b, y=None, *, with_loss=False):
    B, D = x.shape
    C = w_t.shape[1]
    b2d = b.reshape(1, C).astype(jnp.float32)

    tb = _pick_block_b(B, D, C)
    nb = pl.cdiv(B, tb)

    compiler_params = pltpu.CompilerParams(
        dimension_semantics=("parallel",),
        vmem_limit_bytes=32 * 1024 * 1024)

    if not with_loss:
        return pl.pallas_call(
            _linear_softmax_kernel,
            out_shape=jax.ShapeDtypeStruct((B, C), jnp.float32),
            grid=(nb,),
            in_specs=[
                pl.BlockSpec((tb, D), lambda i: (i, 0)),
                pl.BlockSpec((D, C), lambda i: (0, 0)),   # weights resident
                pl.BlockSpec((1, C), lambda i: (0, 0)),   # bias resident
            ],
            out_specs=pl.BlockSpec((tb, C), lambda i: (i, 0)),
            compiler_params=compiler_params,
        )(x, w_t, b2d)

    y2d = y.astype(jnp.int32).reshape(-1, 1)
    partials = pl.pallas_call(
        functools.partial(_fused_loss_kernel, batch=B, block_b=tb),
        out_shape=jax.ShapeDtypeStruct((nb, 1, 1), jnp.float32),
        grid=(nb,),
        in_specs=[
            pl.BlockSpec((tb, D), lambda i: (i, 0)),
            pl.BlockSpec((D, C), lambda i: (0, 0)),
            pl.BlockSpec((1, C), lambda i: (0, 0)),
            pl.BlockSpec((tb, 1), lambda i: (i, 0)),
        ],
        out_specs=pl.BlockSpec((1, 1, 1), lambda i: (i, 0, 0)),
        compiler_params=compiler_params,
    )(x, w_t, b2d, y2d)
    # tiny (nb,) reduction outside the kernel; mean over the true batch size
    return jnp.sum(partials) / B


# ----------------------------------------------------------------------------
# Pure-JAX reference for a sanity check
# ----------------------------------------------------------------------------
def _ref_forward(x, w_t, b, y=None):
    logits = x @ w_t + b
    probs = jax.nn.softmax(logits, axis=1)
    if y is None:
        return probs
    logp = jax.nn.log_softmax(probs, axis=1)
    return -jnp.mean(jnp.take_along_axis(logp, y[:, None], axis=1))


if __name__ == "__main__":
    # Shapes consistent with the module: batch=8, input_size=32, classes=5
    B, D, C = 8, 32, 5

    key = jax.random.PRNGKey(0)
    kx, kw, kb, ky = jax.random.split(key, 4)

    x = jax.random.normal(kx, (B, D), dtype=jnp.float32)
    # nn.Linear(input_size, num_classes): weight (C, D), bias (C,)
    w = jax.random.normal(kw, (C, D), dtype=jnp.float32) * 0.1
    b_vec = jax.random.normal(kb, (C,), dtype=jnp.float32) * 0.1
    y = jax.random.randint(ky, (B,), 0, C, dtype=jnp.int32)

    w_t = w.T                      # (D, C) for the kernel matmul

    # Inference path (y=None): softmax probabilities, written as (B, C)
    probs = jax.block_until_ready(torch_model_forward(x, w_t, b_vec))

    # Training path (y given): scalar cross-entropy loss, fused single kernel
    loss = jax.block_until_ready(
        torch_model_forward(x, w_t, b_vec, y, with_loss=True))

    # Verify against pure-JAX f32 reference (tolerance accommodates the bf16
    # MXU operands and the approx EUP reciprocal used inside the loss path)
    ref_probs = _ref_forward(x, w_t, b_vec.reshape(1, C))
    ref_loss = _ref_forward(x, w_t, b_vec.reshape(1, C), y)
    assert jnp.allclose(probs, ref_probs, atol=5e-3, rtol=5e-3)
    assert jnp.allclose(loss, ref_loss, atol=5e-3, rtol=5e-3)

    print("KERNEL_OK")
</pallas_src>

<mosaic_0001>
module attributes {stable_mosaic.version = 11 : i64} {
  func.func @_linear_softmax_kernel(%arg0: i32, %arg1: memref<8x32xf32, #tpu.memory_space<vmem>>, %arg2: memref<32x5xf32, #tpu.memory_space<vmem>>, %arg3: memref<1x5xf32, #tpu.memory_space<vmem>>, %arg4: memref<8x5xf32, #tpu.memory_space<vmem>>) attributes {dimension_semantics = [#tpu.dimension_semantics<parallel>], iteration_bounds = array<i64: 1>, scalar_prefetch = 0 : i64, scratch_operands = 0 : i64, tpu.core_type = #tpu.core_type<tc>, window_params = [{transform_indices = @transform_0, window_bounds = array<i64: 8, 32>}, {pipeline_mode = #tpu.pipeline_mode<synchronous>, transform_indices = @transform_1, window_bounds = array<i64: 32, 5>}, {pipeline_mode = #tpu.pipeline_mode<synchronous>, transform_indices = @transform_2, window_bounds = array<i64: 1, 5>}, {transform_indices = @transform_3, window_bounds = array<i64: 8, 5>}]} {
    %c0 = arith.constant 0 : index
    %c0_0 = arith.constant 0 : index
    %0 = vector.load %arg1[%c0, %c0_0] : memref<8x32xf32, #tpu.memory_space<vmem>>, vector<8x32xf32>
    %1 = arith.truncf %0 : vector<8x32xf32> to vector<8x32xbf16>
    %c0_1 = arith.constant 0 : index
    %c0_2 = arith.constant 0 : index
    %2 = vector.load %arg2[%c0_1, %c0_2] : memref<32x5xf32, #tpu.memory_space<vmem>>, vector<32x5xf32>
    %3 = arith.truncf %2 : vector<32x5xf32> to vector<32x5xbf16>
    %cst = arith.constant dense<0.000000e+00> : vector<8x5xf32>
    %4 = tpu.matmul %1, %3, %cst {dimension_numbers = #tpu.dot_dimension_numbers<[1], [0], [0], [1], [0, 0, 1, 1], [], []>} : vector<8x32xbf16>, vector<32x5xbf16>, vector<8x5xf32> -> vector<8x5xf32>
    %c0_3 = arith.constant 0 : index
    %c0_4 = arith.constant 0 : index
    %5 = vector.load %arg3[%c0_3, %c0_4] : memref<1x5xf32, #tpu.memory_space<vmem>>, vector<1x5xf32>
    %6 = vector.broadcast %5 : vector<1x5xf32> to vector<8x5xf32>
    %7 = arith.addf %4, %6 : vector<8x5xf32>
    %cst_5 = arith.constant dense<0xFF800000> : vector<8xf32>
    %8 = vector.multi_reduction <maximumf>, %7, %cst_5 [1] : vector<8x5xf32> to vector<8xf32>
    %9 = vector.shape_cast %8 : vector<8xf32> to vector<8x1xf32>
    %10 = vector.broadcast %9 : vector<8x1xf32> to vector<8x5xf32>
    %11 = arith.subf %7, %10 : vector<8x5xf32>
    %12 = math.exp %11 : vector<8x5xf32>
    %cst_6 = arith.constant dense<0.000000e+00> : vector<8xf32>
    %13 = vector.multi_reduction <add>, %12, %cst_6 [1] : vector<8x5xf32> to vector<8xf32>
    %14 = vector.shape_cast %13 : vector<8xf32> to vector<8x1xf32>
    %15 = vector.broadcast %14 : vector<8x1xf32> to vector<8x5xf32>
    %16 = arith.divf %12, %15 : vector<8x5xf32>
    %c0_7 = arith.constant 0 : index
    %c0_8 = arith.constant 0 : index
    %17 = vector.load %arg4[%c0_7, %c0_8] : memref<8x5xf32, #tpu.memory_space<vmem>>, vector<8x5xf32>
    tpu.vector_store %arg4[%c0_7, %c0_8], %16 {strides = array<i32>} : memref<8x5xf32, #tpu.memory_space<vmem>>, vector<8x5xf32>,
    return
  }
  func.func @transform_0(%arg0: i32) -> (i32, i32) {
    %c0_i32 = arith.constant 0 : i32
    %c0_i32_0 = arith.constant 0 : i32
    return %arg0, %c0_i32 : i32, i32
  }
  func.func @transform_1(%arg0: i32) -> (i32, i32) {
    %c0_i32 = arith.constant 0 : i32
    %c0_i32_0 = arith.constant 0 : i32
    %c0_i32_1 = arith.constant 0 : i32
    return %c0_i32, %c0_i32_0 : i32, i32
  }
  func.func @transform_2(%arg0: i32) -> (i32, i32) {
    %c0_i32 = arith.constant 0 : i32
    %c0_i32_0 = arith.constant 0 : i32
    %c0_i32_1 = arith.constant 0 : i32
    return %c0_i32, %c0_i32_0 : i32, i32
  }
  func.func @transform_3(%arg0: i32) -> (i32, i32) {
    %c0_i32 = arith.constant 0 : i32
    %c0_i32_0 = arith.constant 0 : i32
    return %arg0, %c0_i32 : i32, i32
  }
}

</mosaic_0001>

<llo_original>
// kernel: torch_model_forward.1
$region0: #{torch_model_forward.1}
  #allocation0 [shape = 'u32[]', space=smem, size = 0x4, offset = 0x4, fixed_abs, tag = 'smem constant byte address 0x4 - core index']
  #allocation1 [shape = 'u32[144,128]{1,0:T(1,128)}', space=vmem, size = 0x12000, scoped, tag = 'internal scratch']
  %s0 = inlined_call_operand.vmem [shape: f32[8,32], index: 0, kind: input, shape index: {}]
  %s1 = inlined_call_operand.vmem [shape: f32[32,5], index: 1, kind: input, shape index: {}]
  %s2 = inlined_call_operand.vmem [shape: f32[1,5], index: 2, kind: input, shape index: {}]
  %s3 = inlined_call_operand.hbm [shape: f32[8,5], index: 3, kind: output, shape index: {}]
  %s4 = sld [smem:[#allocation0]]
  $region22: #{torch_model_forward.1} parent=0
    _
  %s6 = ssub.s32 1, %s4
  %s7 = scalar_select 0, %s6, %s4
  $region1: #{torch_model_forward.1} parent=0
    #allocation2 [shape = 'u8[4096]{0}', space=vmem, size = 0x1000, scoped, tag = 'output window, operand 0, single buffered']
    #allocation3 [shape = 's32[1]{0}', space=sflag, size = 0x4, scoped, tag = 'scoped memory for torch_model_forward.1']
    %8 = vsyncpa [#allocation3], 0
    // Predicated region
    $region2: #{torch_model_forward.1} parent=1 // pred_check
      _
    $region3: #{torch_model_forward.1} parent=1 // pred_check_branch
      %10 = sbr.rel (0) target = $region5
    $region4: #{torch_model_forward.1} parent=1 // pred_region
      _
    $region5: #{torch_model_forward.1} parent=1 // pred_fallthru
      _
    // Predicated region
    $region6: #{torch_model_forward.1} parent=1 // pred_check
      _
    $region7: #{torch_model_forward.1} parent=1 // pred_check_branch
      %12 = sbr.rel (0) target = $region9
    $region8: #{torch_model_forward.1} parent=1 // pred_region
      _
    $region9: #{torch_model_forward.1} parent=1 // pred_fallthru
      _
    // Predicated region
    $region10: #{torch_model_forward.1} parent=1 // pred_check
      _
    $region11: #{torch_model_forward.1} parent=1 // pred_check_branch
      %14 = sbr.rel (0) target = $region13
    $region12: #{torch_model_forward.1} parent=1 // pred_region
      _
    $region13: #{torch_model_forward.1} parent=1 // pred_fallthru
      _
    %v16 = vld [vmem:[%s0] sm:$0xff]
    %v17 = vpack.c.bf16 %v16, %v16
    %v18 = vld [vmem:[%s1] sm:$0xff]
    %v19 = vld [vmem:[%s1 + $0x8] sm:$0xff]
    %v20 = vld [vmem:[%s1 + $0x10] sm:$0xff]
    %v21 = vld [vmem:[%s1 + $0x18] sm:$0xff]
    %v22 = vpack.c.bf16 %v19, %v18
    %v23 = vpack.c.bf16 %v21, %v20
    %v24 = vld [vmem:[%s2] sm:$0x1]
    %v26 = vlaneseq
    %v27 = vshrl.u32 %v26, 7
    %v28 = vsub.s32 0, %v27
    %v29 = vrot.slane %v24, %v28
    %vm31 = vcmask 261120
    %v33 = vsel %vm31, %v17, 0
    %35 = vmatprep.subr.bf16.mxu0 0
    %36 = vmatpush1.bf16.msra.mxu0 %v22
    %37 = vmatprep.subr.bf16.mxu0 0
    %38 = vmatpush1.bf16.msra.mxu0 %v23
    %39 = vmatprep.subr.bf16.mxu0 0
    %40 = vmatpush1.bf16.msra.mxu0 0
    %41 = vmatprep.subr.bf16.mxu0 0
    %42 = vmatpush1.bf16.msra.mxu0 0
    %43 = vmatprep.subr.bf16.mxu0 0
    %44 = vmatpush1.bf16.msra.mxu0 0
    %45 = vmatprep.subr.bf16.mxu0 0
    %46 = vmatpush1.bf16.msra.mxu0 0
    %47 = vmatprep.subr.bf16.mxu0 0
    %48 = vmatpush1.bf16.msra.mxu0 0
    %49 = vmatprep.subr.bf16.mxu0 0
    %50 = vmatpush1.bf16.msra.mxu0 0
    %51 = vmatprep.subr.bf16.mxu0 0
    %52 = vmatpush1.bf16.msra.mxu0 0
    %53 = vmatprep.subr.bf16.mxu0 0
    %54 = vmatpush1.bf16.msra.mxu0 0
    %55 = vmatprep.subr.bf16.mxu0 0
    %56 = vmatpush1.bf16.msra.mxu0 0
    %57 = vmatprep.subr.bf16.mxu0 0
    %58 = vmatpush1.bf16.msra.mxu0 0
    %59 = vmatprep.subr.bf16.mxu0 0
    %60 = vmatpush1.bf16.msra.mxu0 0
    %61 = vmatprep.subr.bf16.mxu0 0
    %62 = vmatpush1.bf16.msra.mxu0 0
    %63 = vmatprep.subr.bf16.mxu0 0
    %64 = vmatpush1.bf16.msra.mxu0 0
    %65 = vmatprep.subr.bf16.mxu0 0
    %66 = vmatpush1.bf16.msra.mxu0 0
    %67 = vmatprep.mubr.bf16.mxu0 0
    %68 = vmatmul.mubr.bf16.gmra.mrb[0].mxu0 %v33
    %v69 = vpop.f32.mrb[0].mxu0
    %v70 = vadd.f32 %v29, %v69
    %v71 = vpop.f32.mrb[0].mxu0
    %v72 = vpop.f32.mrb[0].mxu0
    %v73 = vpop.f32.mrb[0].mxu0
    %74 = vdwg.mxu0
    %vm75 = vcmask 39936
    %v76 = vsel %vm75, %v70, -inf
    %77 = vmax.xlane.f32.xlu0 %v76
    %v78 = vpop.xlane.xlu0 %77
    %v79 = vsub.f32 %v70, %v78
    %v80 = vmul.f32 %v79, 1.442695
    %v81 = vpow.pop %v80
    %v82 = vsel %vm75, %v81, 0.0
    %83 = vadd.xlane.f32.xlu0 %v82
    %v84 = vpop.xlane.xlu0 %83
    %v85 = vrcp.pop %v84
    %v86 = vmul.f32 %v81, %v85
    %87 = vst.msk [vmem:[#allocation2] sm:$0xff] %vm75, %v86
    // Predicated region
    $region14: #{torch_model_forward.1} parent=1 // pred_check
      _
    $region15: #{torch_model_forward.1} parent=1 // pred_check_branch
      %89 = sbr.rel (0) target = $region17
    $region16: #{torch_model_forward.1} parent=1 // pred_region
      %s91 = ssub.s32 128, 128
      %92 = vsyncadd [#allocation3], %s91
      %s94 = sshll.u32 [#allocation2], 4
      %s95 = int_to_ptr.vmem [resolvable:$true] %s94
      %97 = dma.vmem_to_hbm [thread:$0]  %s95, 128, %s3, [#allocation3]
    $region17: #{torch_model_forward.1} parent=1 // pred_fallthru
      _
    // Predicated region
    $region18: #{torch_model_forward.1} parent=1 // pred_check
      _
    $region19: #{torch_model_forward.1} parent=1 // pred_check_branch
      %99 = sbr.rel (0) target = $region21
    $region20: #{torch_model_forward.1} parent=1 // pred_region
      %100 = dma.done [#allocation3], 128
    $region21: #{torch_model_forward.1} parent=1 // pred_fallthru
      _
    %101 = vsyncpa [#allocation3], 1

</llo_original>
